<compile_context>
chip_gen: v7x
topology: tpu7x:2x2x1
jax: 0.10.0
libtpu: 0.0.40
codegen_flags: <defaults>
</compile_context>

<pallas_src>
import functools

import jax
import jax.numpy as jnp
from jax.experimental import pallas as pl
from jax.experimental.pallas import tpu as pltpu


# ---------------------------------------------------------------------------
# kernel
# ---------------------------------------------------------------------------
def qnet_kernel(ci_ref, w1_ref, w2_ref, w3_ref, wo_ref, bias_ref, out_ref,
                *, bf16_epilogue):
    H1 = w1_ref.shape[1]
    H2 = w2_ref.shape[1]
    H3 = w3_ref.shape[1]
    HO = wo_ref.shape[1]          # lane-padded head width (multiple of 128)

    ep = jnp.bfloat16 if bf16_epilogue else jnp.float32

    # One packed bias buffer -> one DMA; hoist the four row loads to kernel top.
    b1 = bias_ref[0:1, 0:H1].astype(ep)
    b2 = bias_ref[1:2, 0:H2].astype(ep)
    b3 = bias_ref[2:3, 0:H3].astype(ep)
    bo = bias_ref[3:4, 0:HO]                       # head bias added in f32

    # --- input sanitization: nan_to_num(0) + clamp(-10, 10), in f32 ---------
    # TODO(synk): torch also prints 'NaN detected in input!'; a host-side print
    # has no clean in-kernel equivalent, so sanitization is applied
    # unconditionally (numerically identical).
    ci = ci_ref[...]
    ci = jnp.where(jnp.isnan(ci), jnp.float32(0.0), ci)
    ci = jnp.clip(ci, -10.0, 10.0)

    def dense_relu(h_bf16, w_ref, b):
        # MXU matmul, f32 accumulation.
        acc = jnp.dot(h_bf16, w_ref[...], preferred_element_type=jnp.float32)
        if bf16_epilogue:
            # v6e/v7x: cast the accumulator once, then bias/ReLU on packed
            # bf16 vregs and feed the next dot directly.
            return jnp.maximum(acc.astype(jnp.bfloat16) + b, 0.0)
        # v5e: no bf16 VALU path -> keep the epilogue in f32, cast for the MXU.
        return jnp.maximum(acc + b, 0.0).astype(jnp.bfloat16)

    h = dense_relu(ci.astype(jnp.bfloat16), w1_ref, b1)   # fc1 (single K=32 dot)
    h = dense_relu(h, w2_ref, b2)                          # fc2
    h = dense_relu(h, w3_ref, b3)                          # fc3

    # fused per-actuator heads: one lane-dense matmul + packed bf16 store.
    acc = jnp.dot(h, wo_ref[...], preferred_element_type=jnp.float32)
    out_ref[...] = (acc + bo).astype(out_ref.dtype)


# ---------------------------------------------------------------------------
# wrapper
# ---------------------------------------------------------------------------
def _round_up(n, m):
    return ((n + m - 1) // m) * m


def _tpu_flavor():
    """Best-effort generation sniff: (bf16-VALU available, #TensorCores)."""
    try:
        kind = jax.devices()[0].device_kind.lower()
    except Exception:                                    # non-TPU fallback
        kind = ""
    has_bf16_valu = "v5" not in kind      # v5e has no bf16 VPU/EUP path
    num_tensorcores = 2 if "v7" in kind else 1
    return has_bf16_valu, num_tensorcores


def qnetwork_forward(x, sensor_history, kernel_params,
                     num_actuators, actions_per_actuator, *, tm=None):
    """x: (B, state_size) f32, sensor_history: (B, sensor_history_size) f32."""
    w1, w2, w3, wo, bias = kernel_params      # bf16 weights, packed f32 bias
    B = x.shape[0]
    total_in = x.shape[1] + sensor_history.shape[1]
    out_pad = wo.shape[1]
    n_out = num_actuators * actions_per_actuator

    bf16_epilogue, num_tc = _tpu_flavor()

    # concat in the wrapper (trivial XLA op) so fc1 is a single K=total_in dot.
    ci = jnp.concatenate([x, sensor_history], axis=1).astype(jnp.float32)

    # Batch tile: as large as reasonable (cap 512) to amortize the ~0.35us/step
    # grid overhead; on multi-TC chips keep >= num_tc grid steps so
    # dimension_semantics=("parallel",) splits the batch across cores.
    # Multi-step tiles are rounded to 16 rows (bf16 output sublane packing).
    TM_MAX = 512
    if tm is not None:
        TM = tm
    elif num_tc > 1 and B > 16:
        TM = min(TM_MAX, _round_up(pl.cdiv(B, num_tc), 16))
    else:
        TM = min(TM_MAX, max(8, _round_up(B, 8)))
    Bp = _round_up(B, TM)
    if Bp != B:
        ci = jnp.pad(ci, ((0, Bp - B), (0, 0)))

    flops = 2 * Bp * (total_in * w1.shape[1]
                      + w1.shape[1] * w2.shape[1]
                      + w2.shape[1] * w3.shape[1]
                      + w3.shape[1] * out_pad)
    weight_bytes = sum(int(a.size) * a.dtype.itemsize
                       for a in (w1, w2, w3, wo, bias))
    io_bytes = int(ci.size) * 4 + Bp * out_pad * 2       # bf16 output store

    kernel = functools.partial(qnet_kernel, bf16_epilogue=bf16_epilogue)

    flat = pl.pallas_call(
        kernel,
        out_shape=jax.ShapeDtypeStruct((Bp, out_pad), jnp.bfloat16),
        grid=(Bp // TM,),
        in_specs=[
            pl.BlockSpec((TM, total_in), lambda i: (i, 0)),   # batch-tiled input
            pl.BlockSpec(w1.shape, lambda i: (0, 0)),          # weights stay resident
            pl.BlockSpec(w2.shape, lambda i: (0, 0)),
            pl.BlockSpec(w3.shape, lambda i: (0, 0)),
            pl.BlockSpec(wo.shape, lambda i: (0, 0)),
            pl.BlockSpec(bias.shape, lambda i: (0, 0)),        # single packed bias DMA
        ],
        out_specs=pl.BlockSpec((TM, out_pad), lambda i: (i, 0)),
        compiler_params=pltpu.CompilerParams(
            dimension_semantics=("parallel",)),
        cost_estimate=pl.CostEstimate(flops=int(flops),
                                      transcendentals=0,
                                      bytes_accessed=int(weight_bytes + io_bytes)),
    )(ci, w1, w2, w3, wo, bias)

    # slice off batch / lane padding; reshape == torch.stack(outputs, dim=1).
    return flat[:B, :n_out].astype(jnp.float32).reshape(
        B, num_actuators, actions_per_actuator)


# ---------------------------------------------------------------------------
# deterministic parameter construction (xavier_uniform_ weights, zero biases)
# ---------------------------------------------------------------------------
def xavier_uniform(key, fan_in, fan_out):
    bound = (6.0 / (fan_in + fan_out)) ** 0.5
    # (in, out) layout so the kernel does plain x @ W (== torch's x @ W.T)
    return jax.random.uniform(key, (fan_in, fan_out), jnp.float32,
                              minval=-bound, maxval=bound)


def make_params(key, state_size, sensor_history_size,
                num_actuators, actions_per_actuator):
    total_in = state_size + sensor_history_size
    keys = jax.random.split(key, 3 + num_actuators)
    w1 = xavier_uniform(keys[0], total_in, 256)
    w2 = xavier_uniform(keys[1], 256, 256)
    w3 = xavier_uniform(keys[2], 256, 128)
    # per-actuator heads concatenated along the output-feature axis
    # (actuator-major order == torch.stack(outputs, dim=1)).
    head_ws = [xavier_uniform(keys[3 + a], 128, actions_per_actuator)
               for a in range(num_actuators)]
    wo = jnp.concatenate(head_ws, axis=1)                  # (128, A*ape)

    b1 = jnp.zeros((256,), jnp.float32)
    b2 = jnp.zeros((256,), jnp.float32)
    b3 = jnp.zeros((128,), jnp.float32)
    bo = jnp.zeros((num_actuators * actions_per_actuator,), jnp.float32)
    return w1, w2, w3, wo, b1, b2, b3, bo


def pack_params(w1, w2, w3, wo, b1, b2, b3, bo):
    """bf16 weights, lane-padded heads, one packed (8, BW) f32 bias tile."""
    n_out = wo.shape[1]
    out_pad = max(128, ((n_out + 127) // 128) * 128)
    wo_p = jnp.pad(wo, ((0, 0), (0, out_pad - n_out)))     # zero-pad head lanes

    BW = max(w1.shape[1], w2.shape[1], w3.shape[1], out_pad)
    bias = jnp.zeros((8, BW), jnp.float32)
    bias = bias.at[0, :b1.shape[0]].set(b1)
    bias = bias.at[1, :b2.shape[0]].set(b2)
    bias = bias.at[2, :b3.shape[0]].set(b3)
    bias = bias.at[3, :bo.shape[0]].set(bo)

    return (w1.astype(jnp.bfloat16), w2.astype(jnp.bfloat16),
            w3.astype(jnp.bfloat16), wo_p.astype(jnp.bfloat16), bias)


# ---------------------------------------------------------------------------
# plain-JAX reference mirroring the kernel numerics (bf16 weights/epilogue)
# ---------------------------------------------------------------------------
def reference_forward(x, sensor_history, kernel_params, f32_bias,
                      num_actuators, actions_per_actuator, bf16_epilogue):
    w1b, w2b, w3b, wob, _ = kernel_params
    b1, b2, b3, bo = f32_bias
    ci = jnp.concatenate([x, sensor_history], axis=1)
    ci = jnp.clip(jnp.nan_to_num(ci, nan=0.0), -10.0, 10.0)

    def dense_relu(h_bf16, w, b):
        acc = jnp.dot(h_bf16, w, preferred_element_type=jnp.float32)
        if bf16_epilogue:
            return jnp.maximum(acc.astype(jnp.bfloat16) + b.astype(jnp.bfloat16),
                               0.0)
        return jnp.maximum(acc + b, 0.0).astype(jnp.bfloat16)

    h = dense_relu(ci.astype(jnp.bfloat16), w1b, b1)
    h = dense_relu(h, w2b, b2)
    h = dense_relu(h, w3b, b3)
    acc = jnp.dot(h, wob, preferred_element_type=jnp.float32)
    n_out = num_actuators * actions_per_actuator
    out = (acc[:, :n_out] + bo).astype(jnp.bfloat16).astype(jnp.float32)
    return out.reshape(x.shape[0], num_actuators, actions_per_actuator)


# ---------------------------------------------------------------------------
# main: build inputs, run kernel, check against JAX references
# ---------------------------------------------------------------------------
if __name__ == "__main__":
    state_size = 16
    sensor_history_size = 16
    num_actuators = 4
    actions_per_actuator = 3
    batch = 2

    key = jax.random.PRNGKey(0)
    k_params, k_x, k_sh = jax.random.split(key, 3)

    f32_params = make_params(k_params, state_size, sensor_history_size,
                             num_actuators, actions_per_actuator)
    w1, w2, w3, wo, b1, b2, b3, bo = f32_params
    kernel_params = pack_params(*f32_params)

    x = jax.random.normal(k_x, (batch, state_size), jnp.float32) * 3.0
    sensor_history = jax.random.normal(k_sh, (batch, sensor_history_size),
                                       jnp.float32) * 3.0
    x = x.at[0, 0].set(jnp.nan)        # exercise the NaN-sanitization path

    out = qnetwork_forward(x, sensor_history, kernel_params,
                           num_actuators, actions_per_actuator)
    out = jax.block_until_ready(out)

    assert out.shape == (batch, num_actuators, actions_per_actuator), out.shape
    assert not bool(jnp.isnan(out).any())

    bf16_epilogue, _ = _tpu_flavor()

    # --- reference 1: same bf16 computation in plain JAX (tight-ish tol) -----
    ref_bf = reference_forward(x, sensor_history, kernel_params,
                               (b1, b2, b3, bo),
                               num_actuators, actions_per_actuator,
                               bf16_epilogue)
    assert jnp.allclose(out, ref_bf, atol=2e-2, rtol=2e-2), \
        float(jnp.max(jnp.abs(out - ref_bf)))

    # --- reference 2: full-f32 torch semantics (loose tol: bf16 params) ------
    ci = jnp.concatenate([x, sensor_history], axis=1)
    ci = jnp.clip(jnp.nan_to_num(ci, nan=0.0), -10.0, 10.0)
    h = jax.nn.relu(ci @ w1 + b1)
    h = jax.nn.relu(h @ w2 + b2)
    h = jax.nn.relu(h @ w3 + b3)
    ref_f32 = (h @ wo + bo).reshape(batch, num_actuators, actions_per_actuator)
    assert jnp.allclose(out, ref_f32, atol=1e-1, rtol=1e-1), \
        float(jnp.max(jnp.abs(out - ref_f32)))

    # --- exercise the multi-step, batch-padded grid path ----------------------
    batch2 = 20
    k_x2, k_sh2 = jax.random.split(jax.random.PRNGKey(1))
    x2 = jax.random.normal(k_x2, (batch2, state_size), jnp.float32)
    sh2 = jax.random.normal(k_sh2, (batch2, sensor_history_size), jnp.float32)
    out2 = jax.block_until_ready(
        qnetwork_forward(x2, sh2, kernel_params,
                         num_actuators, actions_per_actuator, tm=16))
    ref2 = reference_forward(x2, sh2, kernel_params, (b1, b2, b3, bo),
                             num_actuators, actions_per_actuator, bf16_epilogue)
    assert out2.shape == (batch2, num_actuators, actions_per_actuator)
    assert jnp.allclose(out2, ref2, atol=2e-2, rtol=2e-2), \
        float(jnp.max(jnp.abs(out2 - ref2)))

    print("KERNEL_OK")
</pallas_src>

<mosaic_0001>
module attributes {stable_mosaic.version = 11 : i64} {
  func.func @qnet_kernel(%arg0: i32, %arg1: memref<8x32xf32, #tpu.memory_space<vmem>>, %arg2: memref<32x256xbf16, #tpu.memory_space<vmem>>, %arg3: memref<256x256xbf16, #tpu.memory_space<vmem>>, %arg4: memref<256x128xbf16, #tpu.memory_space<vmem>>, %arg5: memref<128x128xbf16, #tpu.memory_space<vmem>>, %arg6: memref<8x256xf32, #tpu.memory_space<vmem>>, %arg7: memref<8x128xbf16, #tpu.memory_space<vmem>>) attributes {dimension_semantics = [#tpu.dimension_semantics<parallel>], iteration_bounds = array<i64: 1>, scalar_prefetch = 0 : i64, scratch_operands = 0 : i64, tpu.core_type = #tpu.core_type<tc>, window_params = [{transform_indices = @transform_0, window_bounds = array<i64: 8, 32>}, {pipeline_mode = #tpu.pipeline_mode<synchronous>, transform_indices = @transform_1, window_bounds = array<i64: 32, 256>}, {pipeline_mode = #tpu.pipeline_mode<synchronous>, transform_indices = @transform_2, window_bounds = array<i64: 256, 256>}, {pipeline_mode = #tpu.pipeline_mode<synchronous>, transform_indices = @transform_3, window_bounds = array<i64: 256, 128>}, {pipeline_mode = #tpu.pipeline_mode<synchronous>, transform_indices = @transform_4, window_bounds = array<i64: 128, 128>}, {pipeline_mode = #tpu.pipeline_mode<synchronous>, transform_indices = @transform_5, window_bounds = array<i64: 8, 256>}, {transform_indices = @transform_6, window_bounds = array<i64: 8, 128>}]} {
    %c0 = arith.constant 0 : index
    %c0_0 = arith.constant 0 : index
    %0 = vector.load %arg6[%c0, %c0_0] : memref<8x256xf32, #tpu.memory_space<vmem>>, vector<1x256xf32>
    %1 = arith.truncf %0 : vector<1x256xf32> to vector<1x256xbf16>
    %c1 = arith.constant 1 : index
    %c0_1 = arith.constant 0 : index
    %2 = vector.load %arg6[%c1, %c0_1] : memref<8x256xf32, #tpu.memory_space<vmem>>, vector<1x256xf32>
    %3 = arith.truncf %2 : vector<1x256xf32> to vector<1x256xbf16>
    %c2 = arith.constant 2 : index
    %c0_2 = arith.constant 0 : index
    %4 = vector.load %arg6[%c2, %c0_2] : memref<8x256xf32, #tpu.memory_space<vmem>>, vector<1x128xf32>
    %5 = arith.truncf %4 : vector<1x128xf32> to vector<1x128xbf16>
    %c3 = arith.constant 3 : index
    %c0_3 = arith.constant 0 : index
    %6 = vector.load %arg6[%c3, %c0_3] : memref<8x256xf32, #tpu.memory_space<vmem>>, vector<1x128xf32>
    %c0_4 = arith.constant 0 : index
    %c0_5 = arith.constant 0 : index
    %7 = vector.load %arg1[%c0_4, %c0_5] : memref<8x32xf32, #tpu.memory_space<vmem>>, vector<8x32xf32>
    %8 = arith.cmpf one, %7, %7 : vector<8x32xf32>
    %cst = arith.constant 0.000000e+00 : f32
    %9 = vector.broadcast %cst : f32 to vector<8x32xf32>
    %10 = arith.select %8, %9, %7 : vector<8x32xi1>, vector<8x32xf32>
    %cst_6 = arith.constant -1.000000e+01 : f32
    %cst_7 = arith.constant 1.000000e+01 : f32
    %11 = vector.broadcast %cst_6 : f32 to vector<8x32xf32>
    %12 = arith.maximumf %11, %10 : vector<8x32xf32>
    %13 = vector.broadcast %cst_7 : f32 to vector<8x32xf32>
    %14 = arith.minimumf %13, %12 : vector<8x32xf32>
    %15 = arith.truncf %14 : vector<8x32xf32> to vector<8x32xbf16>
    %c0_8 = arith.constant 0 : index
    %c0_9 = arith.constant 0 : index
    %16 = vector.load %arg2[%c0_8, %c0_9] : memref<32x256xbf16, #tpu.memory_space<vmem>>, vector<32x256xbf16>
    %cst_10 = arith.constant dense<0.000000e+00> : vector<8x256xf32>
    %17 = tpu.matmul %15, %16, %cst_10 {dimension_numbers = #tpu.dot_dimension_numbers<[1], [0], [0], [1], [0, 0, 1, 1], [], []>} : vector<8x32xbf16>, vector<32x256xbf16>, vector<8x256xf32> -> vector<8x256xf32>
    %18 = arith.truncf %17 : vector<8x256xf32> to vector<8x256xbf16>
    %19 = vector.broadcast %1 : vector<1x256xbf16> to vector<8x256xbf16>
    %20 = arith.addf %18, %19 : vector<8x256xbf16>
    %cst_11 = arith.constant 0.000000e+00 : bf16
    %21 = vector.broadcast %cst_11 : bf16 to vector<8x256xbf16>
    %22 = arith.maximumf %20, %21 : vector<8x256xbf16>
    %c0_12 = arith.constant 0 : index
    %c0_13 = arith.constant 0 : index
    %23 = vector.load %arg3[%c0_12, %c0_13] : memref<256x256xbf16, #tpu.memory_space<vmem>>, vector<256x256xbf16>
    %cst_14 = arith.constant dense<0.000000e+00> : vector<8x256xf32>
    %24 = tpu.matmul %22, %23, %cst_14 {dimension_numbers = #tpu.dot_dimension_numbers<[1], [0], [0], [1], [0, 0, 1, 1], [], []>} : vector<8x256xbf16>, vector<256x256xbf16>, vector<8x256xf32> -> vector<8x256xf32>
    %25 = arith.truncf %24 : vector<8x256xf32> to vector<8x256xbf16>
    %26 = vector.broadcast %3 : vector<1x256xbf16> to vector<8x256xbf16>
    %27 = arith.addf %25, %26 : vector<8x256xbf16>
    %cst_15 = arith.constant 0.000000e+00 : bf16
    %28 = vector.broadcast %cst_15 : bf16 to vector<8x256xbf16>
    %29 = arith.maximumf %27, %28 : vector<8x256xbf16>
    %c0_16 = arith.constant 0 : index
    %c0_17 = arith.constant 0 : index
    %30 = vector.load %arg4[%c0_16, %c0_17] : memref<256x128xbf16, #tpu.memory_space<vmem>>, vector<256x128xbf16>
    %cst_18 = arith.constant dense<0.000000e+00> : vector<8x128xf32>
    %31 = tpu.matmul %29, %30, %cst_18 {dimension_numbers = #tpu.dot_dimension_numbers<[1], [0], [0], [1], [0, 0, 1, 1], [], []>} : vector<8x256xbf16>, vector<256x128xbf16>, vector<8x128xf32> -> vector<8x128xf32>
    %32 = arith.truncf %31 : vector<8x128xf32> to vector<8x128xbf16>
    %33 = vector.broadcast %5 : vector<1x128xbf16> to vector<8x128xbf16>
    %34 = arith.addf %32, %33 : vector<8x128xbf16>
    %cst_19 = arith.constant 0.000000e+00 : bf16
    %35 = vector.broadcast %cst_19 : bf16 to vector<8x128xbf16>
    %36 = arith.maximumf %34, %35 : vector<8x128xbf16>
    %c0_20 = arith.constant 0 : index
    %c0_21 = arith.constant 0 : index
    %37 = vector.load %arg5[%c0_20, %c0_21] : memref<128x128xbf16, #tpu.memory_space<vmem>>, vector<128x128xbf16>
    %cst_22 = arith.constant dense<0.000000e+00> : vector<8x128xf32>
    %38 = tpu.matmul %36, %37, %cst_22 {dimension_numbers = #tpu.dot_dimension_numbers<[1], [0], [0], [1], [0, 0, 1, 1], [], []>} : vector<8x128xbf16>, vector<128x128xbf16>, vector<8x128xf32> -> vector<8x128xf32>
    %39 = vector.broadcast %6 : vector<1x128xf32> to vector<8x128xf32>
    %40 = arith.addf %38, %39 : vector<8x128xf32>
    %41 = arith.truncf %40 : vector<8x128xf32> to vector<8x128xbf16>
    %c0_23 = arith.constant 0 : index
    %c0_24 = arith.constant 0 : index
    %42 = vector.load %arg7[%c0_23, %c0_24] : memref<8x128xbf16, #tpu.memory_space<vmem>>, vector<8x128xbf16>
    tpu.vector_store %arg7[%c0_23, %c0_24], %41 {strides = array<i32>} : memref<8x128xbf16, #tpu.memory_space<vmem>>, vector<8x128xbf16>,
    return
  }
  func.func @transform_0(%arg0: i32) -> (i32, i32) {
    %c0_i32 = arith.constant 0 : i32
    %c0_i32_0 = arith.constant 0 : i32
    return %arg0, %c0_i32 : i32, i32
  }
  func.func @transform_1(%arg0: i32) -> (i32, i32) {
    %c0_i32 = arith.constant 0 : i32
    %c0_i32_0 = arith.constant 0 : i32
    %c0_i32_1 = arith.constant 0 : i32
    return %c0_i32, %c0_i32_0 : i32, i32
  }
  func.func @transform_2(%arg0: i32) -> (i32, i32) {
    %c0_i32 = arith.constant 0 : i32
    %c0_i32_0 = arith.constant 0 : i32
    %c0_i32_1 = arith.constant 0 : i32
    return %c0_i32, %c0_i32_0 : i32, i32
  }
  func.func @transform_3(%arg0: i32) -> (i32, i32) {
    %c0_i32 = arith.constant 0 : i32
    %c0_i32_0 = arith.constant 0 : i32
    %c0_i32_1 = arith.constant 0 : i32
    return %c0_i32, %c0_i32_0 : i32, i32
  }
  func.func @transform_4(%arg0: i32) -> (i32, i32) {
    %c0_i32 = arith.constant 0 : i32
    %c0_i32_0 = arith.constant 0 : i32
    %c0_i32_1 = arith.constant 0 : i32
    return %c0_i32, %c0_i32_0 : i32, i32
  }
  func.func @transform_5(%arg0: i32) -> (i32, i32) {
    %c0_i32 = arith.constant 0 : i32
    %c0_i32_0 = arith.constant 0 : i32
    %c0_i32_1 = arith.constant 0 : i32
    return %c0_i32, %c0_i32_0 : i32, i32
  }
  func.func @transform_6(%arg0: i32) -> (i32, i32) {
    %c0_i32 = arith.constant 0 : i32
    %c0_i32_0 = arith.constant 0 : i32
    return %arg0, %c0_i32 : i32, i32
  }
}

</mosaic_0001>

<llo_original>
// kernel: tpu_custom_call.1
$region0: #{tpu_custom_call.1}
  #allocation0 [shape = 'u32[]', space=smem, size = 0x4, offset = 0x4, fixed_abs, tag = 'smem constant byte address 0x4 - core index']
  #allocation1 [shape = 'u32[144,128]{1,0:T(1,128)}', space=vmem, size = 0x12000, scoped, tag = 'internal scratch']
  %s0 = inlined_call_operand.hbm [shape: f32[8,32], index: 0, kind: input, shape index: {}]
  %s1 = inlined_call_operand.hbm [shape: bf16[32,256], index: 1, kind: input, shape index: {}]
  %s2 = inlined_call_operand.hbm [shape: bf16[256,256], index: 2, kind: input, shape index: {}]
  %s3 = inlined_call_operand.hbm [shape: bf16[256,128], index: 3, kind: input, shape index: {}]
  %s4 = inlined_call_operand.hbm [shape: bf16[128,128], index: 4, kind: input, shape index: {}]
  %s5 = inlined_call_operand.vmem [shape: f32[8,256], index: 5, kind: input, shape index: {}]
  %s6 = inlined_call_operand.hbm [shape: bf16[8,128], index: 6, kind: output, shape index: {}]
  %s7 = sld [smem:[#allocation0]]
  $region54: #{tpu_custom_call.1} parent=0
    _
  %s9 = ssub.s32 1, %s7
  %s10 = scalar_select 0, %s9, %s7
  $region1: #{tpu_custom_call.1} parent=0
    #allocation2 [shape = 'u8[4096]{0}', space=vmem, size = 0x1000, scoped, tag = 'input window, operand 0, single buffered']
    #allocation3 [shape = 's32[1]{0}', space=sflag, size = 0x4, scoped, tag = 'scoped memory for tpu_custom_call.1']
    #allocation4 [shape = 's32[1]{0}', space=sflag, size = 0x4, scoped, tag = 'scoped memory for tpu_custom_call.1']
    #allocation5 [shape = 'u8[16384]{0}', space=vmem, size = 0x4000, scoped, tag = 'input window, operand 1, single buffered']
    #allocation6 [shape = 's32[1]{0}', space=sflag, size = 0x4, scoped, tag = 'scoped memory for tpu_custom_call.1']
    #allocation7 [shape = 'u8[131072]{0}', space=vmem, size = 0x20000, scoped, tag = 'input window, operand 2, single buffered']
    #allocation8 [shape = 'u8[65536]{0}', space=vmem, size = 0x10000, scoped, tag = 'input window, operand 3, single buffered']
    #allocation9 [shape = 's32[1]{0}', space=sflag, size = 0x4, scoped, tag = 'scoped memory for tpu_custom_call.1']
    #allocation10 [shape = 'u8[32768]{0}', space=vmem, size = 0x8000, scoped, tag = 'input window, operand 4, single buffered']
    #allocation11 [shape = 'u8[2048]{0}', space=vmem, size = 0x800, scoped, tag = 'output window, operand 0, single buffered']
    %11 = vsyncpa [#allocation3], 0
    %12 = vsyncpa [#allocation6], 0
    %13 = vsyncpa [#allocation9], 0
    %14 = vsyncpa [#allocation4], 0
    // Predicated region
    $region2: #{tpu_custom_call.1} parent=1 // pred_check
      _
    $region3: #{tpu_custom_call.1} parent=1 // pred_check_branch
      %16 = sbr.rel (0) target = $region5
    $region4: #{tpu_custom_call.1} parent=1 // pred_region
      %s18 = ssub.s32 128, 128
      %19 = vsyncadd [#allocation3], %s18
      %s21 = sshll.u32 [#allocation2], 4
      %s22 = int_to_ptr.vmem [resolvable:$true] %s21
      %24 = dma.hbm_to_vmem [thread:$0]  %s0, 128, %s22, [#allocation3]
    $region5: #{tpu_custom_call.1} parent=1 // pred_fallthru
      _
    // Predicated region
    $region6: #{tpu_custom_call.1} parent=1 // pred_check
      _
    $region7: #{tpu_custom_call.1} parent=1 // pred_check_branch
      %26 = sbr.rel (0) target = $region9
    $region8: #{tpu_custom_call.1} parent=1 // pred_region
      %s28 = ssub.s32 512, 512
      %29 = vsyncadd [#allocation6], %s28
      %s30 = sshll.u32 [#allocation5], 4
      %s31 = int_to_ptr.vmem [resolvable:$true] %s30
      %36 = dma.hbm_to_vmem [thread:$0]  %s1, 512, %s31, [#allocation6], 128, 128, 8
    $region9: #{tpu_custom_call.1} parent=1 // pred_fallthru
      _
    // Predicated region
    $region10: #{tpu_custom_call.1} parent=1 // pred_check
      _
    $region11: #{tpu_custom_call.1} parent=1 // pred_check_branch
      %38 = sbr.rel (0) target = $region13
    $region12: #{tpu_custom_call.1} parent=1 // pred_region
      %s40 = ssub.s32 4096, 4096
      %41 = vsyncadd [#allocation6], %s40
      %s42 = sshll.u32 [#allocation7], 4
      %s43 = int_to_ptr.vmem [resolvable:$true] %s42
      %48 = dma.hbm_to_vmem [thread:$0]  %s2, 4096, %s43, [#allocation6], 128, 128, 8
    $region13: #{tpu_custom_call.1} parent=1 // pred_fallthru
      _
    // Predicated region
    $region14: #{tpu_custom_call.1} parent=1 // pred_check
      _
    $region15: #{tpu_custom_call.1} parent=1 // pred_check_branch
      %50 = sbr.rel (0) target = $region17
    $region16: #{tpu_custom_call.1} parent=1 // pred_region
      %s52 = ssub.s32 2048, 2048
      %53 = vsyncadd [#allocation9], %s52
      %s54 = sshll.u32 [#allocation8], 4
      %s55 = int_to_ptr.vmem [resolvable:$true] %s54
      %60 = dma.hbm_to_vmem [thread:$0]  %s3, 2048, %s55, [#allocation9], 64, 64, 4
    $region17: #{tpu_custom_call.1} parent=1 // pred_fallthru
      _
    // Predicated region
    $region18: #{tpu_custom_call.1} parent=1 // pred_check
      _
    $region19: #{tpu_custom_call.1} parent=1 // pred_check_branch
      %62 = sbr.rel (0) target = $region21
    $region20: #{tpu_custom_call.1} parent=1 // pred_region
      %s64 = ssub.s32 1024, 1024
      %65 = vsyncadd [#allocation9], %s64
      %s66 = sshll.u32 [#allocation10], 4
      %s67 = int_to_ptr.vmem [resolvable:$true] %s66
      %72 = dma.hbm_to_vmem [thread:$0]  %s4, 1024, %s67, [#allocation9], 64, 64, 4
    $region21: #{tpu_custom_call.1} parent=1 // pred_fallthru
      _
    // Predicated region
    $region22: #{tpu_custom_call.1} parent=1 // pred_check
      _
    $region23: #{tpu_custom_call.1} parent=1 // pred_check_branch
      %74 = sbr.rel (0) target = $region25
    $region24: #{tpu_custom_call.1} parent=1 // pred_region
      _
    $region25: #{tpu_custom_call.1} parent=1 // pred_fallthru
      _
    // Predicated region
    $region26: #{tpu_custom_call.1} parent=1 // pred_check
      _
    $region27: #{tpu_custom_call.1} parent=1 // pred_check_branch
      %76 = sbr.rel (0) target = $region29
    $region28: #{tpu_custom_call.1} parent=1 // pred_region
      %77 = dma.done [#allocation3], 128
    $region29: #{tpu_custom_call.1} parent=1 // pred_fallthru
      _
    // Predicated region
    $region30: #{tpu_custom_call.1} parent=1 // pred_check
      _
    $region31: #{tpu_custom_call.1} parent=1 // pred_check_branch
      %79 = sbr.rel (0) target = $region33
    $region32: #{tpu_custom_call.1} parent=1 // pred_region
      %80 = dma.done [#allocation6], 512
    $region33: #{tpu_custom_call.1} parent=1 // pred_fallthru
      _
    // Predicated region
    $region34: #{tpu_custom_call.1} parent=1 // pred_check
      _
    $region35: #{tpu_custom_call.1} parent=1 // pred_check_branch
      %82 = sbr.rel (0) target = $region37
    $region36: #{tpu_custom_call.1} parent=1 // pred_region
      %83 = dma.done [#allocation6], 4096
    $region37: #{tpu_custom_call.1} parent=1 // pred_fallthru
      _
    // Predicated region
    $region38: #{tpu_custom_call.1} parent=1 // pred_check
      _
    $region39: #{tpu_custom_call.1} parent=1 // pred_check_branch
      %85 = sbr.rel (0) target = $region41
    $region40: #{tpu_custom_call.1} parent=1 // pred_region
      %86 = dma.done [#allocation9], 2048
    $region41: #{tpu_custom_call.1} parent=1 // pred_fallthru
      _
    // Predicated region
    $region42: #{tpu_custom_call.1} parent=1 // pred_check
      _
    $region43: #{tpu_custom_call.1} parent=1 // pred_check_branch
      %88 = sbr.rel (0) target = $region45
    $region44: #{tpu_custom_call.1} parent=1 // pred_region
      %89 = dma.done [#allocation9], 1024
    $region45: #{tpu_custom_call.1} parent=1 // pred_fallthru
      _
    %v91 = vld [vmem:[%s5] ss:$8 sm:$0x3]
    %v93 = vlaneseq
    %v94 = vshrl.u32 %v93, 7
    %v95 = vsub.s32 0, %v94
    %v96 = vrot.slane %v91, %v95
    %v97 = vlaneseq
    %v98 = vshrl.u32 %v97, 7
    %v99 = vsub.s32 1, %v98
    %v100 = vrot.slane %v91, %v99
    %v103 = vpack.c.bf16 %v96, %v96
    %v104 = vpack.c.bf16 %v100, %v100
    %s105 = scalar_lea.vmem %s5, 1
    %v106 = vld [vmem:[%s105] ss:$8 sm:$0x3]
    %v108 = vlaneseq
    %v109 = vshrl.u32 %v108, 7
    %v110 = vsub.s32 0, %v109
    %v111 = vrot.slane %v106, %v110
    %v112 = vlaneseq
    %v113 = vshrl.u32 %v112, 7
    %v114 = vsub.s32 1, %v113
    %v115 = vrot.slane %v106, %v114
    %v118 = vpack.c.bf16 %v111, %v111
    %v119 = vpack.c.bf16 %v115, %v115
    %v120 = vld [vmem:[%s5 + $0x2] ss:$0 sm:$0xff]
    %v121 = vpack.c.bf16 %v120, %v120
    %v122 = vld [vmem:[%s5 + $0x3] ss:$0 sm:$0xff]
    %v123 = vld [vmem:[#allocation2] sm:$0xff]
    %vm124 = vcmp.ne.f32.partialorder %v123, %v123
    %v125 = vsel %vm124, 0.0, %v123
    %v126 = vmax.f32 %v125, -10.0
    %v127 = vmin.f32 %v126, 10.0
    %v128 = vpack.c.bf16 %v127, %v127
    %v129 = vld [vmem:[#allocation5] sm:$0xff]
    %v130 = vld [vmem:[#allocation5 + $0x8] sm:$0xff]
    %v131 = vld [vmem:[#allocation5 + $0x10] sm:$0xff]
    %v132 = vld [vmem:[#allocation5 + $0x18] sm:$0xff]
    %v137 = vunpack.c.l.b16 %v129
    %v138 = vunpack.c.h.b16 %v129
    %v139 = vunpack.c.l.b16 %v130
    %v140 = vunpack.c.h.b16 %v130
    %v141 = vunpack.c.l.b16 %v131
    %v142 = vunpack.c.h.b16 %v131
    %v143 = vunpack.c.l.b16 %v132
    %v144 = vunpack.c.h.b16 %v132
    %v145 = vpack.c.b16 %v139, %v137
    %v146 = vpack.c.b16 %v140, %v138
    %v147 = vpack.c.b16 %v143, %v141
    %v148 = vpack.c.b16 %v144, %v142
    %vm153 = vcmask 261120
    %v155 = vsel %vm153, %v128, 0
    %157 = vmatprep.subr.bf16.mxu0 %v146
    %158 = vmatpush1.bf16.msra.mxu0 %v145
    %159 = vmatprep.subr.bf16.mxu0 %v148
    %160 = vmatpush1.bf16.msra.mxu0 %v147
    %161 = vmatprep.subr.bf16.mxu0 0
    %162 = vmatpush1.bf16.msra.mxu0 0
    %163 = vmatprep.subr.bf16.mxu0 0
    %164 = vmatpush1.bf16.msra.mxu0 0
    %165 = vmatprep.subr.bf16.mxu0 0
    %166 = vmatpush1.bf16.msra.mxu0 0
    %167 = vmatprep.subr.bf16.mxu0 0
    %168 = vmatpush1.bf16.msra.mxu0 0
    %169 = vmatprep.subr.bf16.mxu0 0
    %170 = vmatpush1.bf16.msra.mxu0 0
    %171 = vmatprep.subr.bf16.mxu0 0
    %172 = vmatpush1.bf16.msra.mxu0 0
    %173 = vmatprep.subr.bf16.mxu0 0
    %174 = vmatpush1.bf16.msra.mxu0 0
    %175 = vmatprep.subr.bf16.mxu0 0
    %176 = vmatpush1.bf16.msra.mxu0 0
    %177 = vmatprep.subr.bf16.mxu0 0
    %178 = vmatpush1.bf16.msra.mxu0 0
    %179 = vmatprep.subr.bf16.mxu0 0
    %180 = vmatpush1.bf16.msra.mxu0 0
    %181 = vmatprep.subr.bf16.mxu0 0
    %182 = vmatpush1.bf16.msra.mxu0 0
    %183 = vmatprep.subr.bf16.mxu0 0
    %184 = vmatpush1.bf16.msra.mxu0 0
    %185 = vmatprep.subr.bf16.mxu0 0
    %186 = vmatpush1.bf16.msra.mxu0 0
    %187 = vmatprep.subr.bf16.mxu0 0
    %188 = vmatpush1.bf16.msra.mxu0 0
    %189 = vmatprep.mubr.bf16.mxu0 0
    %190 = vmatmul.mubr.bf16.gmra.mrb[0].mxu0 %v155
    %v191 = vpop.f32.mrb[0].mxu0
    %v192 = vadd.f32 0.0, %v191
    %v193 = vpop.f32.mrb[0].mxu0
    %v194 = vadd.f32 0.0, %v193
    %v195 = vpop.f32.mrb[0].mxu0
    %v196 = vpop.f32.mrb[0].mxu0
    %197 = vdwg.mxu0
    %v198 = vpack.c.bf16 %v192, %v192
    %v199 = vpack.c.bf16 %v194, %v194
    %v201 = vpack.i.b16 %v103, %v103
    %v203 = vlaneseq
    %v204 = vshrl.u32 %v203, 7
    %v205 = vsub.s32 0, %v204
    %v206 = vrot.slane %v201, %v205
    %v208 = vpack.i.b16 %v104, %v104
    %v210 = vlaneseq
    %v211 = vshrl.u32 %v210, 7
    %v212 = vsub.s32 0, %v211
    %v213 = vrot.slane %v208, %v212
    %v214 = vadd.bf16 %v198, %v206
    %v215 = vadd.bf16 %v199, %v213
    %v216 = vmax.bf16 %v214, 0
    %v217 = vmax.bf16 %v215, 0
    %v218 = vld [vmem:[#allocation7] sm:$0xff]
    %v219 = vld [vmem:[#allocation7 + $0x8] sm:$0xff]
    %v220 = vld [vmem:[#allocation7 + $0x10] sm:$0xff]
    %v221 = vld [vmem:[#allocation7 + $0x18] sm:$0xff]
    %v222 = vld [vmem:[#allocation7 + $0x20] sm:$0xff]
    %v223 = vld [vmem:[#allocation7 + $0x28] sm:$0xff]
    %v224 = vld [vmem:[#allocation7 + $0x30] sm:$0xff]
    %v225 = vld [vmem:[#allocation7 + $0x38] sm:$0xff]
    %v226 = vld [vmem:[#allocation7 + $0x40] sm:$0xff]
    %v227 = vld [vmem:[#allocation7 + $0x48] sm:$0xff]
    %v228 = vld [vmem:[#allocation7 + $0x50] sm:$0xff]
    %v229 = vld [vmem:[#allocation7 + $0x58] sm:$0xff]
    %v230 = vld [vmem:[#allocation7 + $0x60] sm:$0xff]
    %v231 = vld [vmem:[#allocation7 + $0x68] sm:$0xff]
    %v232 = vld [vmem:[#allocation7 + $0x70] sm:$0xff]
    %v233 = vld [vmem:[#allocation7 + $0x78] sm:$0xff]
    %v234 = vld [vmem:[#allocation7 + $0x80] sm:$0xff]
    %v235 = vld [vmem:[#allocation7 + $0x88] sm:$0xff]
    %v236 = vld [vmem:[#allocation7 + $0x90] sm:$0xff]
    %v237 = vld [vmem:[#allocation7 + $0x98] sm:$0xff]
    %v238 = vld [vmem:[#allocation7 + $0xa0] sm:$0xff]
    %v239 = vld [vmem:[#allocation7 + $0xa8] sm:$0xff]
    %v240 = vld [vmem:[#allocation7 + $0xb0] sm:$0xff]
    %v241 = vld [vmem:[#allocation7 + $0xb8] sm:$0xff]
    %v242 = vld [vmem:[#allocation7 + $0xc0] sm:$0xff]
    %v243 = vld [vmem:[#allocation7 + $0xc8] sm:$0xff]
    %v244 = vld [vmem:[#allocation7 + $0xd0] sm:$0xff]
    %v245 = vld [vmem:[#allocation7 + $0xd8] sm:$0xff]
    %v246 = vld [vmem:[#allocation7 + $0xe0] sm:$0xff]
    %v247 = vld [vmem:[#allocation7 + $0xe8] sm:$0xff]
    %v248 = vld [vmem:[#allocation7 + $0xf0] sm:$0xff]
    %v249 = vld [vmem:[#allocation7 + $0xf8] sm:$0xff]
    %v282 = vunpack.c.l.b16 %v218
    %v283 = vunpack.c.h.b16 %v218
    %v284 = vunpack.c.l.b16 %v219
    %v285 = vunpack.c.h.b16 %v219
    %v286 = vunpack.c.l.b16 %v220
    %v287 = vunpack.c.h.b16 %v220
    %v288 = vunpack.c.l.b16 %v221
    %v289 = vunpack.c.h.b16 %v221
    %v290 = vunpack.c.l.b16 %v222
    %v291 = vunpack.c.h.b16 %v222
    %v292 = vunpack.c.l.b16 %v223
    %v293 = vunpack.c.h.b16 %v223
    %v294 = vunpack.c.l.b16 %v224
    %v295 = vunpack.c.h.b16 %v224
    %v296 = vunpack.c.l.b16 %v225
    %v297 = vunpack.c.h.b16 %v225
    %v298 = vunpack.c.l.b16 %v226
    %v299 = vunpack.c.h.b16 %v226
    %v300 = vunpack.c.l.b16 %v227
    %v301 = vunpack.c.h.b16 %v227
    %v302 = vunpack.c.l.b16 %v228
    %v303 = vunpack.c.h.b16 %v228
    %v304 = vunpack.c.l.b16 %v229
    %v305 = vunpack.c.h.b16 %v229
    %v306 = vunpack.c.l.b16 %v230
    %v307 = vunpack.c.h.b16 %v230
    %v308 = vunpack.c.l.b16 %v231
    %v309 = vunpack.c.h.b16 %v231
    %v310 = vunpack.c.l.b16 %v232
    %v311 = vunpack.c.h.b16 %v232
    %v312 = vunpack.c.l.b16 %v233
    %v313 = vunpack.c.h.b16 %v233
    %v314 = vunpack.c.l.b16 %v234
    %v315 = vunpack.c.h.b16 %v234
    %v316 = vunpack.c.l.b16 %v235
    %v317 = vunpack.c.h.b16 %v235
    %v318 = vunpack.c.l.b16 %v236
    %v319 = vunpack.c.h.b16 %v236
    %v320 = vunpack.c.l.b16 %v237
    %v321 = vunpack.c.h.b16 %v237
    %v322 = vunpack.c.l.b16 %v238
    %v323 = vunpack.c.h.b16 %v238
    %v324 = vunpack.c.l.b16 %v239
    %v325 = vunpack.c.h.b16 %v239
    %v326 = vunpack.c.l.b16 %v240
    %v327 = vunpack.c.h.b16 %v240
    %v328 = vunpack.c.l.b16 %v241
    %v329 = vunpack.c.h.b16 %v241
    %v330 = vunpack.c.l.b16 %v242
    %v331 = vunpack.c.h.b16 %v242
    %v332 = vunpack.c.l.b16 %v243
    %v333 = vunpack.c.h.b16 %v243
    %v334 = vunpack.c.l.b16 %v244
    %v335 = vunpack.c.h.b16 %v244
    %v336 = vunpack.c.l.b16 %v245
    %v337 = vunpack.c.h.b16 %v245
    %v338 = vunpack.c.l.b16 %v246
    %v339 = vunpack.c.h.b16 %v246
    %v340 = vunpack.c.l.b16 %v247
    %v341 = vunpack.c.h.b16 %v247
    %v342 = vunpack.c.l.b16 %v248
    %v343 = vunpack.c.h.b16 %v248
    %v344 = vunpack.c.l.b16 %v249
    %v345 = vunpack.c.h.b16 %v249
    %v346 = vpack.c.b16 %v284, %v282
    %v347 = vpack.c.b16 %v285, %v283
    %v348 = vpack.c.b16 %v288, %v286
    %v349 = vpack.c.b16 %v289, %v287
    %v350 = vpack.c.b16 %v292, %v290
    %v351 = vpack.c.b16 %v293, %v291
    %v352 = vpack.c.b16 %v296, %v294
    %v353 = vpack.c.b16 %v297, %v295
    %v354 = vpack.c.b16 %v300, %v298
    %v355 = vpack.c.b16 %v301, %v299
    %v356 = vpack.c.b16 %v304, %v302
    %v357 = vpack.c.b16 %v305, %v303
    %v358 = vpack.c.b16 %v308, %v306
    %v359 = vpack.c.b16 %v309, %v307
    %v360 = vpack.c.b16 %v312, %v310
    %v361 = vpack.c.b16 %v313, %v311
    %v362 = vpack.c.b16 %v316, %v314
    %v363 = vpack.c.b16 %v317, %v315
    %v364 = vpack.c.b16 %v320, %v318
    %v365 = vpack.c.b16 %v321, %v319
    %v366 = vpack.c.b16 %v324, %v322
    %v367 = vpack.c.b16 %v325, %v323
    %v368 = vpack.c.b16 %v328, %v326
    %v369 = vpack.c.b16 %v329, %v327
    %v370 = vpack.c.b16 %v332, %v330
    %v371 = vpack.c.b16 %v333, %v331
    %v372 = vpack.c.b16 %v336, %v334
    %v373 = vpack.c.b16 %v337, %v335
    %v374 = vpack.c.b16 %v340, %v338
    %v375 = vpack.c.b16 %v341, %v339
    %v376 = vpack.c.b16 %v344, %v342
    %v377 = vpack.c.b16 %v345, %v343
    %410 = vmatprep.subr.bf16.mxu0 %v347
    %411 = vmatpush1.bf16.msra.mxu0 %v346
    %412 = vmatprep.subr.bf16.mxu0 %v349
    %413 = vmatpush1.bf16.msra.mxu0 %v348
    %414 = vmatprep.subr.bf16.mxu0 %v351
    %415 = vmatpush1.bf16.msra.mxu0 %v350
    %416 = vmatprep.subr.bf16.mxu0 %v353
    %417 = vmatpush1.bf16.msra.mxu0 %v352
    %418 = vmatprep.subr.bf16.mxu0 %v355
    %419 = vmatpush1.bf16.msra.mxu0 %v354
    %420 = vmatprep.subr.bf16.mxu0 %v357
    %421 = vmatpush1.bf16.msra.mxu0 %v356
    %422 = vmatprep.subr.bf16.mxu0 %v359
    %423 = vmatpush1.bf16.msra.mxu0 %v358
    %424 = vmatprep.subr.bf16.mxu0 %v361
    %425 = vmatpush1.bf16.msra.mxu0 %v360
    %426 = vmatprep.subr.bf16.mxu0 %v363
    %427 = vmatpush1.bf16.msra.mxu0 %v362
    %428 = vmatprep.subr.bf16.mxu0 %v365
    %429 = vmatpush1.bf16.msra.mxu0 %v364
    %430 = vmatprep.subr.bf16.mxu0 %v367
    %431 = vmatpush1.bf16.msra.mxu0 %v366
    %432 = vmatprep.subr.bf16.mxu0 %v369
    %433 = vmatpush1.bf16.msra.mxu0 %v368
    %434 = vmatprep.subr.bf16.mxu0 %v371
    %435 = vmatpush1.bf16.msra.mxu0 %v370
    %436 = vmatprep.subr.bf16.mxu0 %v373
    %437 = vmatpush1.bf16.msra.mxu0 %v372
    %438 = vmatprep.subr.bf16.mxu0 %v375
    %439 = vmatpush1.bf16.msra.mxu0 %v374
    %440 = vmatprep.subr.bf16.mxu0 %v377
    %441 = vmatpush1.bf16.msra.mxu0 %v376
    %442 = vmatprep.mubr.bf16.mxu0 %v217
    %443 = vmatmul.mubr.bf16.gmra.mrb[0].mxu0 %v216
    %v444 = vpop.f32.mrb[0].mxu0
    %v445 = vadd.f32 0.0, %v444
    %v446 = vpop.f32.mrb[0].mxu0
    %v447 = vadd.f32 0.0, %v446
    %v448 = vpop.f32.mrb[0].mxu0
    %v449 = vpop.f32.mrb[0].mxu0
    %450 = vdwg.mxu0
    %v451 = vpack.c.bf16 %v445, %v445
    %v452 = vpack.c.bf16 %v447, %v447
    %v454 = vpack.i.b16 %v118, %v118
    %v456 = vlaneseq
    %v457 = vshrl.u32 %v456, 7
    %v458 = vsub.s32 0, %v457
    %v459 = vrot.slane %v454, %v458
    %v461 = vpack.i.b16 %v119, %v119
    %v463 = vlaneseq
    %v464 = vshrl.u32 %v463, 7
    %v465 = vsub.s32 0, %v464
    %v466 = vrot.slane %v461, %v465
    %v467 = vadd.bf16 %v451, %v459
    %v468 = vadd.bf16 %v452, %v466
    %v469 = vmax.bf16 %v467, 0
    %v470 = vmax.bf16 %v468, 0
    %v471 = vld [vmem:[#allocation8] sm:$0xf]
    %v472 = vld [vmem:[#allocation8 + $0x4] sm:$0xf]
    %v473 = vld [vmem:[#allocation8 + $0x8] sm:$0xf]
    %v474 = vld [vmem:[#allocation8 + $0xc] sm:$0xf]
    %v475 = vld [vmem:[#allocation8 + $0x10] sm:$0xf]
    %v476 = vld [vmem:[#allocation8 + $0x14] sm:$0xf]
    %v477 = vld [vmem:[#allocation8 + $0x18] sm:$0xf]
    %v478 = vld [vmem:[#allocation8 + $0x1c] sm:$0xf]
    %v479 = vld [vmem:[#allocation8 + $0x20] sm:$0xf]
    %v480 = vld [vmem:[#allocation8 + $0x24] sm:$0xf]
    %v481 = vld [vmem:[#allocation8 + $0x28] sm:$0xf]
    %v482 = vld [vmem:[#allocation8 + $0x2c] sm:$0xf]
    %v483 = vld [vmem:[#allocation8 + $0x30] sm:$0xf]
    %v484 = vld [vmem:[#allocation8 + $0x34] sm:$0xf]
    %v485 = vld [vmem:[#allocation8 + $0x38] sm:$0xf]
    %v486 = vld [vmem:[#allocation8 + $0x3c] sm:$0xf]
    %v487 = vld [vmem:[#allocation8 + $0x40] sm:$0xf]
    %v488 = vld [vmem:[#allocation8 + $0x44] sm:$0xf]
    %v489 = vld [vmem:[#allocation8 + $0x48] sm:$0xf]
    %v490 = vld [vmem:[#allocation8 + $0x4c] sm:$0xf]
    %v491 = vld [vmem:[#allocation8 + $0x50] sm:$0xf]
    %v492 = vld [vmem:[#allocation8 + $0x54] sm:$0xf]
    %v493 = vld [vmem:[#allocation8 + $0x58] sm:$0xf]
    %v494 = vld [vmem:[#allocation8 + $0x5c] sm:$0xf]
    %v495 = vld [vmem:[#allocation8 + $0x60] sm:$0xf]
    %v496 = vld [vmem:[#allocation8 + $0x64] sm:$0xf]
    %v497 = vld [vmem:[#allocation8 + $0x68] sm:$0xf]
    %v498 = vld [vmem:[#allocation8 + $0x6c] sm:$0xf]
    %v499 = vld [vmem:[#allocation8 + $0x70] sm:$0xf]
    %v500 = vld [vmem:[#allocation8 + $0x74] sm:$0xf]
    %v501 = vld [vmem:[#allocation8 + $0x78] sm:$0xf]
    %v502 = vld [vmem:[#allocation8 + $0x7c] sm:$0xf]
    %v535 = vunpack.c.l.b16 %v471
    %v536 = vunpack.c.l.b16 %v472
    %v537 = vunpack.c.l.b16 %v473
    %v538 = vunpack.c.l.b16 %v474
    %v539 = vunpack.c.l.b16 %v475
    %v540 = vunpack.c.l.b16 %v476
    %v541 = vunpack.c.l.b16 %v477
    %v542 = vunpack.c.l.b16 %v478
    %v543 = vunpack.c.l.b16 %v479
    %v544 = vunpack.c.l.b16 %v480
    %v545 = vunpack.c.l.b16 %v481
    %v546 = vunpack.c.l.b16 %v482
    %v547 = vunpack.c.l.b16 %v483
    %v548 = vunpack.c.l.b16 %v484
    %v549 = vunpack.c.l.b16 %v485
    %v550 = vunpack.c.l.b16 %v486
    %v551 = vunpack.c.l.b16 %v487
    %v552 = vunpack.c.l.b16 %v488
    %v553 = vunpack.c.l.b16 %v489
    %v554 = vunpack.c.l.b16 %v490
    %v555 = vunpack.c.l.b16 %v491
    %v556 = vunpack.c.l.b16 %v492
    %v557 = vunpack.c.l.b16 %v493
    %v558 = vunpack.c.l.b16 %v494
    %v559 = vunpack.c.l.b16 %v495
    %v560 = vunpack.c.l.b16 %v496
    %v561 = vunpack.c.l.b16 %v497
    %v562 = vunpack.c.l.b16 %v498
    %v563 = vunpack.c.l.b16 %v499
    %v564 = vunpack.c.l.b16 %v500
    %v565 = vunpack.c.l.b16 %v501
    %v566 = vunpack.c.l.b16 %v502
    %v567 = vpack.c.b16 %v536, %v535
    %v568 = vpack.c.b16 %v538, %v537
    %v569 = vpack.c.b16 %v540, %v539
    %v570 = vpack.c.b16 %v542, %v541
    %v571 = vpack.c.b16 %v544, %v543
    %v572 = vpack.c.b16 %v546, %v545
    %v573 = vpack.c.b16 %v548, %v547
    %v574 = vpack.c.b16 %v550, %v549
    %v575 = vpack.c.b16 %v552, %v551
    %v576 = vpack.c.b16 %v554, %v553
    %v577 = vpack.c.b16 %v556, %v555
    %v578 = vpack.c.b16 %v558, %v557
    %v579 = vpack.c.b16 %v560, %v559
    %v580 = vpack.c.b16 %v562, %v561
    %v581 = vpack.c.b16 %v564, %v563
    %v582 = vpack.c.b16 %v566, %v565
    %599 = vmatprep.subr.bf16.mxu0 0
    %600 = vmatpush1.bf16.msra.mxu0 %v567
    %601 = vmatprep.subr.bf16.mxu0 0
    %602 = vmatpush1.bf16.msra.mxu0 %v568
    %603 = vmatprep.subr.bf16.mxu0 0
    %604 = vmatpush1.bf16.msra.mxu0 %v569
    %605 = vmatprep.subr.bf16.mxu0 0
    %606 = vmatpush1.bf16.msra.mxu0 %v570
    %607 = vmatprep.subr.bf16.mxu0 0
    %608 = vmatpush1.bf16.msra.mxu0 %v571
    %609 = vmatprep.subr.bf16.mxu0 0
    %610 = vmatpush1.bf16.msra.mxu0 %v572
    %611 = vmatprep.subr.bf16.mxu0 0
    %612 = vmatpush1.bf16.msra.mxu0 %v573
    %613 = vmatprep.subr.bf16.mxu0 0
    %614 = vmatpush1.bf16.msra.mxu0 %v574
    %615 = vmatprep.subr.bf16.mxu0 0
    %616 = vmatpush1.bf16.msra.mxu0 %v575
    %617 = vmatprep.subr.bf16.mxu0 0
    %618 = vmatpush1.bf16.msra.mxu0 %v576
    %619 = vmatprep.subr.bf16.mxu0 0
    %620 = vmatpush1.bf16.msra.mxu0 %v577
    %621 = vmatprep.subr.bf16.mxu0 0
    %622 = vmatpush1.bf16.msra.mxu0 %v578
    %623 = vmatprep.subr.bf16.mxu0 0
    %624 = vmatpush1.bf16.msra.mxu0 %v579
    %625 = vmatprep.subr.bf16.mxu0 0
    %626 = vmatpush1.bf16.msra.mxu0 %v580
    %627 = vmatprep.subr.bf16.mxu0 0
    %628 = vmatpush1.bf16.msra.mxu0 %v581
    %629 = vmatprep.subr.bf16.mxu0 0
    %630 = vmatpush1.bf16.msra.mxu0 %v582
    %631 = vmatprep.mubr.bf16.mxu0 %v470
    %632 = vmatmul.mubr.bf16.gmra.mrb[0].mxu0 %v469
    %v633 = vpop.f32.mrb[0].mxu0
    %v634 = vadd.f32 0.0, %v633
    %v635 = vpop.f32.mrb[0].mxu0
    %v636 = vpop.f32.mrb[0].mxu0
    %v637 = vpop.f32.mrb[0].mxu0
    %638 = vdwg.mxu0
    %v639 = vpack.c.bf16 %v634, %v634
    %v640 = vadd.bf16 %v639, %v121
    %v641 = vmax.bf16 %v640, 0
    %v642 = vld [vmem:[#allocation10] sm:$0xf]
    %v643 = vld [vmem:[#allocation10 + $0x4] sm:$0xf]
    %v644 = vld [vmem:[#allocation10 + $0x8] sm:$0xf]
    %v645 = vld [vmem:[#allocation10 + $0xc] sm:$0xf]
    %v646 = vld [vmem:[#allocation10 + $0x10] sm:$0xf]
    %v647 = vld [vmem:[#allocation10 + $0x14] sm:$0xf]
    %v648 = vld [vmem:[#allocation10 + $0x18] sm:$0xf]
    %v649 = vld [vmem:[#allocation10 + $0x1c] sm:$0xf]
    %v650 = vld [vmem:[#allocation10 + $0x20] sm:$0xf]
    %v651 = vld [vmem:[#allocation10 + $0x24] sm:$0xf]
    %v652 = vld [vmem:[#allocation10 + $0x28] sm:$0xf]
    %v653 = vld [vmem:[#allocation10 + $0x2c] sm:$0xf]
    %v654 = vld [vmem:[#allocation10 + $0x30] sm:$0xf]
    %v655 = vld [vmem:[#allocation10 + $0x34] sm:$0xf]
    %v656 = vld [vmem:[#allocation10 + $0x38] sm:$0xf]
    %v657 = vld [vmem:[#allocation10 + $0x3c] sm:$0xf]
    %v674 = vunpack.c.l.b16 %v642
    %v675 = vunpack.c.l.b16 %v643
    %v676 = vunpack.c.l.b16 %v644
    %v677 = vunpack.c.l.b16 %v645
    %v678 = vunpack.c.l.b16 %v646
    %v679 = vunpack.c.l.b16 %v647
    %v680 = vunpack.c.l.b16 %v648
    %v681 = vunpack.c.l.b16 %v649
    %v682 = vunpack.c.l.b16 %v650
    %v683 = vunpack.c.l.b16 %v651
    %v684 = vunpack.c.l.b16 %v652
    %v685 = vunpack.c.l.b16 %v653
    %v686 = vunpack.c.l.b16 %v654
    %v687 = vunpack.c.l.b16 %v655
    %v688 = vunpack.c.l.b16 %v656
    %v689 = vunpack.c.l.b16 %v657
    %v690 = vpack.c.b16 %v675, %v674
    %v691 = vpack.c.b16 %v677, %v676
    %v692 = vpack.c.b16 %v679, %v678
    %v693 = vpack.c.b16 %v681, %v680
    %v694 = vpack.c.b16 %v683, %v682
    %v695 = vpack.c.b16 %v685, %v684
    %v696 = vpack.c.b16 %v687, %v686
    %v697 = vpack.c.b16 %v689, %v688
    %706 = vmatprep.subr.bf16.mxu0 0
    %707 = vmatpush1.bf16.msra.mxu0 %v690
    %708 = vmatprep.subr.bf16.mxu0 0
    %709 = vmatpush1.bf16.msra.mxu0 %v691
    %710 = vmatprep.subr.bf16.mxu0 0
    %711 = vmatpush1.bf16.msra.mxu0 %v692
    %712 = vmatprep.subr.bf16.mxu0 0
    %713 = vmatpush1.bf16.msra.mxu0 %v693
    %714 = vmatprep.subr.bf16.mxu0 0
    %715 = vmatpush1.bf16.msra.mxu0 %v694
    %716 = vmatprep.subr.bf16.mxu0 0
    %717 = vmatpush1.bf16.msra.mxu0 %v695
    %718 = vmatprep.subr.bf16.mxu0 0
    %719 = vmatpush1.bf16.msra.mxu0 %v696
    %720 = vmatprep.subr.bf16.mxu0 0
    %721 = vmatpush1.bf16.msra.mxu0 %v697
    %722 = vmatprep.subr.bf16.mxu0 0
    %723 = vmatpush1.bf16.msra.mxu0 0
    %724 = vmatprep.subr.bf16.mxu0 0
    %725 = vmatpush1.bf16.msra.mxu0 0
    %726 = vmatprep.subr.bf16.mxu0 0
    %727 = vmatpush1.bf16.msra.mxu0 0
    %728 = vmatprep.subr.bf16.mxu0 0
    %729 = vmatpush1.bf16.msra.mxu0 0
    %730 = vmatprep.subr.bf16.mxu0 0
    %731 = vmatpush1.bf16.msra.mxu0 0
    %732 = vmatprep.subr.bf16.mxu0 0
    %733 = vmatpush1.bf16.msra.mxu0 0
    %734 = vmatprep.subr.bf16.mxu0 0
    %735 = vmatpush1.bf16.msra.mxu0 0
    %736 = vmatprep.subr.bf16.mxu0 0
    %737 = vmatpush1.bf16.msra.mxu0 0
    %738 = vmatprep.mubr.bf16.mxu0 0
    %739 = vmatmul.mubr.bf16.gmra.mrb[0].mxu0 %v641
    %v740 = vpop.f32.mrb[0].mxu0
    %v741 = vadd.f32 %v122, %v740
    %v742 = vpop.f32.mrb[0].mxu0
    %v743 = vpop.f32.mrb[0].mxu0
    %v744 = vpop.f32.mrb[0].mxu0
    %745 = vdwg.mxu0
    %v746 = vpack.c.bf16 %v741, %v741
    %747 = vst [vmem:[#allocation11] sm:$0xf] %v746
    // Predicated region
    $region46: #{tpu_custom_call.1} parent=1 // pred_check
      _
    $region47: #{tpu_custom_call.1} parent=1 // pred_check_branch
      %749 = sbr.rel (0) target = $region49
    $region48: #{tpu_custom_call.1} parent=1 // pred_region
      %s751 = ssub.s32 64, 64
      %752 = vsyncadd [#allocation4], %s751
      %s754 = sshll.u32 [#allocation11], 4
      %s755 = int_to_ptr.vmem [resolvable:$true] %s754
      %757 = dma.vmem_to_hbm [thread:$0]  %s755, 64, %s6, [#allocation4]
    $region49: #{tpu_custom_call.1} parent=1 // pred_fallthru
      _
    // Predicated region
    $region50: #{tpu_custom_call.1} parent=1 // pred_check
      _
    $region51: #{tpu_custom_call.1} parent=1 // pred_check_branch
      %759 = sbr.rel (0) target = $region53
    $region52: #{tpu_custom_call.1} parent=1 // pred_region
      %760 = dma.done [#allocation4], 64
    $region53: #{tpu_custom_call.1} parent=1 // pred_fallthru
      _
    %761 = vsyncpa [#allocation3], 1
    %762 = vsyncpa [#allocation6], 1
    %763 = vsyncpa [#allocation9], 1
    %764 = vsyncpa [#allocation4], 1

</llo_original>
